<compile_context>
chip_gen: v7x
topology: tpu7x:2x2x1
jax: 0.10.0
libtpu: 0.0.40
codegen_flags: <defaults>
</compile_context>

<pallas_src>
import functools
import math

import jax
import jax.numpy as jnp
from jax.experimental import pallas as pl
from jax.experimental.pallas import tpu as pltpu


_TARGET_BYTES_PER_INPUT = 4 * 1024 * 1024        # ~4 MiB per input per grid step
_VMEM_LIMIT_BYTES = 48 * 1024 * 1024             # safe on v5e/v6e (128 MiB) and v7x (64 MiB)
_VMEM_HEADROOM = 8 * 1024 * 1024                 # slack for compiler-internal temporaries


# --------------------------------------------------------------------------- #
# Spatial kernel: pixels grouped as (g_tile groups of 128), classes as slabs.
# --------------------------------------------------------------------------- #
def _soft_ce_spatial_kernel(x_ref, t_ref, out_ref, *, chunks, blocks_per_chunk,
                            g_tile, num_groups, targets_sum_to_one):
    j = pl.program_id(1)

    @pl.when(j == 0)
    def _init():
        out_ref[...] = jnp.zeros_like(out_ref)

    x = x_ref[...].astype(jnp.float32)                     # (C, g_tile, 128)
    t = t_ref[...].astype(jnp.float32)

    # Numerically stable log-sum-exp over the class axis (elementwise slab ops).
    m = jnp.max(x, axis=0)                                 # (g_tile, 128)
    lse = m + jnp.log(jnp.sum(jnp.exp(x - m), axis=0))     # (g_tile, 128)
    sum_xt = jnp.sum(x * t, axis=0)                        # (g_tile, 128)

    # sum_c (lse - x_c) * t_c == lse * sum_c t_c - sum_c x_c t_c
    if targets_sum_to_one:
        per_pix = lse - sum_xt                             # (g_tile, 128)
    else:
        per_pix = lse * jnp.sum(t, axis=0) - sum_xt        # (g_tile, 128)

    # Global block index along the group axis (chunks split one image across
    # the parallel grid axis; duplicate blocks of the last chunk are clamped in
    # the index_map and fully masked here).
    if chunks == 1:
        gb = j
    else:
        gb = (pl.program_id(0) % chunks) * blocks_per_chunk + j
    g0 = gb * g_tile

    # Static: does any grid step run past the end of the group axis?
    needs_mask = chunks * blocks_per_chunk * g_tile > num_groups
    if needs_mask:
        is_tail = g0 + g_tile > num_groups

        @pl.when(is_tail)
        def _acc_tail():
            # Mask invalid rows BEFORE the cross-row reduce: garbage rows of a
            # partial DMA may hold NaN/Inf; jnp.where is a select, so they are
            # dropped, not multiplied.
            row = g0 + jax.lax.broadcasted_iota(jnp.int32, per_pix.shape, 0)
            masked = jnp.where(row < num_groups, per_pix, 0.0)
            out_ref[...] += jnp.sum(masked, axis=0, keepdims=True)

        @pl.when(jnp.logical_not(is_tail))
        def _acc_full():
            out_ref[...] += jnp.sum(per_pix, axis=0, keepdims=True)
    else:
        out_ref[...] += jnp.sum(per_pix, axis=0, keepdims=True)


def _spatial_loss_sum(x4, t4, *, targets_sum_to_one, g_tile_override):
    """Sum of per-pixel losses for x4/t4 of shape (N, C, G, 128)."""
    N, C, G, _ = x4.shape
    isz = x4.dtype.itemsize + t4.dtype.itemsize

    # VMEM bytes per pixel of one grid step:
    #   2 pipeline buffers per input (native dtype) + ~4 f32 block temporaries
    #   (x_f32, t_f32, exp(x-m), x*t) + ~6 dense f32 per-pixel rows.
    per_pixel = 2 * C * isz + 4 * C * 4 + 6 * 4
    budget = _VMEM_LIMIT_BYTES - _VMEM_HEADROOM
    pixels = min(
        max(128, _TARGET_BYTES_PER_INPUT // (C * x4.dtype.itemsize)),
        max(128, budget // per_pixel),
        G * 128,
    )
    g_tile = max(1, pixels // 128)
    if g_tile_override is not None:
        g_tile = int(g_tile_override)
    g_tile = min(g_tile, G)
    if g_tile != G:
        # Second-to-last block dim must be a multiple of 8 (or the full extent).
        g_tile = min(G, max(8, (g_tile // 8) * 8))

    num_gblocks = pl.cdiv(G, g_tile)
    # Split the spatial axis across the parallel grid axis when the batch alone
    # cannot feed both TensorCores of a v7x chip.
    chunks = 2 if (N == 1 and num_gblocks >= 2) else 1
    bpc = pl.cdiv(num_gblocks, chunks)

    if chunks == 1:
        def in_map(n, j):
            return (n, 0, j, 0)
    else:
        def in_map(g, j):
            gb = (g % chunks) * bpc + j
            if chunks * bpc != num_gblocks:
                # Clamp the duplicate block(s) of the last chunk; the kernel
                # masks their contribution to zero.
                gb = jnp.minimum(gb, num_gblocks - 1)
            return (g // chunks, 0, gb, 0)

    kernel = functools.partial(
        _soft_ce_spatial_kernel,
        chunks=chunks, blocks_per_chunk=bpc, g_tile=g_tile, num_groups=G,
        targets_sum_to_one=targets_sum_to_one)

    partials = pl.pallas_call(
        kernel,
        out_shape=jax.ShapeDtypeStruct((N * chunks, 1, 128), jnp.float32),
        grid_spec=pltpu.PrefetchScalarGridSpec(
            num_scalar_prefetch=0,
            grid=(N * chunks, bpc),
            in_specs=[
                pl.BlockSpec((None, C, g_tile, 128), in_map),
                pl.BlockSpec((None, C, g_tile, 128), in_map),
            ],
            out_specs=pl.BlockSpec((None, 1, 128), lambda g, j: (g, 0, 0)),
        ),
        compiler_params=pltpu.CompilerParams(
            dimension_semantics=("parallel", "arbitrary"),
            vmem_limit_bytes=_VMEM_LIMIT_BYTES,
        ),
    )(x4, t4)
    return jnp.sum(partials)


# --------------------------------------------------------------------------- #
# Rows kernel: samples/pixels on sublanes, classes on lanes.
# Used for HW == 1 (classification) inputs and sub-128-pixel remainders.
# --------------------------------------------------------------------------- #
def _soft_ce_rows_kernel(x_ref, t_ref, out_ref, *, targets_sum_to_one):
    x = x_ref[...].astype(jnp.float32)                     # (rows_tile, C)
    t = t_ref[...].astype(jnp.float32)
    m = jnp.max(x, axis=1, keepdims=True)
    lse = m + jnp.log(jnp.sum(jnp.exp(x - m), axis=1, keepdims=True))
    sum_xt = jnp.sum(x * t, axis=1, keepdims=True)
    if targets_sum_to_one:
        out_ref[...] = lse - sum_xt
    else:
        out_ref[...] = lse * jnp.sum(t, axis=1, keepdims=True) - sum_xt
    # Rows past the true extent of a partial tail block are never written back
    # by Pallas, and every op above is row-local, so no tail mask is needed.


def _rows_loss_sum(x2, t2, *, targets_sum_to_one):
    """Sum of per-row losses for x2/t2 of shape (R, C), softmax over axis 1."""
    R, C = x2.shape
    isz = x2.dtype.itemsize + t2.dtype.itemsize
    per_row = 2 * C * isz + 4 * C * 4 + 6 * 4
    budget = _VMEM_LIMIT_BYTES - _VMEM_HEADROOM
    rows = min(
        R,
        max(8, _TARGET_BYTES_PER_INPUT // (C * x2.dtype.itemsize)),
        max(8, budget // per_row),
    )
    if rows != R:
        rows = min(R, max(8, (rows // 8) * 8))

    kernel = functools.partial(_soft_ce_rows_kernel,
                               targets_sum_to_one=targets_sum_to_one)
    per_sample = pl.pallas_call(
        kernel,
        out_shape=jax.ShapeDtypeStruct((R, 1), jnp.float32),
        grid_spec=pltpu.PrefetchScalarGridSpec(
            num_scalar_prefetch=0,
            grid=(pl.cdiv(R, rows),),
            in_specs=[
                pl.BlockSpec((rows, C), lambda i: (i, 0)),
                pl.BlockSpec((rows, C), lambda i: (i, 0)),
            ],
            out_specs=pl.BlockSpec((rows, 1), lambda i: (i, 0)),
        ),
        compiler_params=pltpu.CompilerParams(
            dimension_semantics=("parallel",),
            vmem_limit_bytes=_VMEM_LIMIT_BYTES,
        ),
    )(x2, t2)
    return jnp.sum(per_sample)


# --------------------------------------------------------------------------- #
# Public wrapper.
# --------------------------------------------------------------------------- #
def soft_cross_entropy_loss(inputs, targets, reduction="mean",
                            targets_sum_to_one=False, g_tile=None):
    """SoftCrossEntropyLoss forward; softmax over axis 1 of (N, C, ...) inputs.

    targets_sum_to_one: set True if the soft labels are known to be probability
    distributions over the class axis (skips one reduction + multiply).
    g_tile: optional override of the spatial block height (groups of 128 pixels).
    """
    assert inputs.shape == targets.shape, (inputs.shape, targets.shape)
    shape = inputs.shape
    N, C = shape[0], shape[1]
    HW = int(math.prod(shape[2:]))  # == 1 for plain (N, C) inputs

    if N == 0 or HW == 0 or C == 0:
        z = jnp.zeros((), jnp.float32)
        return z / jnp.float32(N * HW) if reduction == "mean" else z

    # Free reshapes (trailing spatial dims are contiguous): no HBM transpose.
    x = inputs.reshape(N, C, HW)
    t = targets.reshape(N, C, HW)

    G = HW // 128            # groups of 128 pixels -> spatial kernel
    rem = HW - G * 128       # < 128 leftover pixels per image -> rows kernel

    total = jnp.zeros((), jnp.float32)
    if G > 0:
        if rem == 0:
            xm, tm = x, t    # reshape below is free
        else:
            # Rare (HW not a multiple of 128): one extra copy of the prefix.
            xm, tm = x[:, :, :G * 128], t[:, :, :G * 128]
        total = total + _spatial_loss_sum(
            xm.reshape(N, C, G, 128), tm.reshape(N, C, G, 128),
            targets_sum_to_one=targets_sum_to_one, g_tile_override=g_tile)
    if rem > 0:
        # Remainder pixels and the HW == 1 classification case: a tiny transpose
        # (< 128 pixels per image; a pure reshape when HW == 1) puts samples on
        # sublanes and classes on lanes.
        xr = jnp.transpose(x[:, :, G * 128:], (0, 2, 1)).reshape(N * rem, C)
        tr = jnp.transpose(t[:, :, G * 128:], (0, 2, 1)).reshape(N * rem, C)
        total = total + _rows_loss_sum(
            xr, tr, targets_sum_to_one=targets_sum_to_one)

    if reduction == "mean":
        total = total / float(N * HW)
    return total


def _reference(inputs, targets, reduction="mean"):
    logp = jax.nn.log_softmax(inputs.astype(jnp.float32), axis=1)
    loss = jnp.sum(-logp * targets.astype(jnp.float32), axis=1)
    return jnp.mean(loss) if reduction == "mean" else jnp.sum(loss)


if __name__ == "__main__":
    key = jax.random.PRNGKey(0)
    k1, k2 = jax.random.split(key)

    def check(shape, reduction, **kw):
        logits = jax.random.normal(k1, shape, dtype=jnp.float32)
        # Soft targets: valid probability distribution over the class axis.
        soft = jax.nn.softmax(
            jax.random.normal(k2, shape, dtype=jnp.float32), axis=1)
        out = jax.block_until_ready(
            soft_cross_entropy_loss(logits, soft, reduction=reduction, **kw))
        ref = _reference(logits, soft, reduction=reduction)
        assert jnp.allclose(out, ref, rtol=1e-5, atol=1e-5), (
            shape, reduction, kw, out, ref)

    check((2, 4, 16, 16), "mean")                       # fast path, single block
    check((2, 4, 10, 20), "sum")                        # odd HW: spatial prefix + remainder rows
    check((8, 32), "mean")                              # classification (HW == 1) rows layout
    check((1, 4, 32, 64), "mean", g_tile=8)             # N==1 -> spatial chunk split (2 chunks)
    check((1, 4, 48, 64), "sum", g_tile=8)              # chunk split with clamped duplicate block
    check((2, 4, 40, 64), "mean", g_tile=8)             # partial tail g-block masking
    check((2, 4, 16, 16), "mean", targets_sum_to_one=True)

    print("KERNEL_OK")
</pallas_src>

<mosaic_0001>
module attributes {stable_mosaic.version = 11 : i64} {
  func.func @_soft_ce_spatial_kernel(%arg0: i32, %arg1: i32, %arg2: memref<1x4x2x128xf32, #tpu.memory_space<vmem>>, %arg3: memref<1x4x2x128xf32, #tpu.memory_space<vmem>>, %arg4: memref<1x1x128xf32, #tpu.memory_space<vmem>>) attributes {dimension_semantics = [#tpu.dimension_semantics<parallel>, #tpu.dimension_semantics<arbitrary>], iteration_bounds = array<i64: 2, 1>, scalar_prefetch = 0 : i64, scratch_operands = 0 : i64, tpu.core_type = #tpu.core_type<tc>, window_params = [{transform_indices = @transform_0, window_bounds = array<i64: 1, 4, 2, 128>}, {transform_indices = @transform_1, window_bounds = array<i64: 1, 4, 2, 128>}, {transform_indices = @transform_2, window_bounds = array<i64: 1, 1, 128>}]} {
    %c0_i32 = arith.constant 0 : i32
    %0 = arith.cmpi eq, %arg1, %c0_i32 : i32
    %1 = arith.extui %0 : i1 to i32
    %c0_i32_0 = arith.constant 0 : i32
    %2 = arith.cmpi ne, %1, %c0_i32_0 : i32
    scf.if %2 {
      %cst_18 = arith.constant 0.000000e+00 : f32
      %28 = vector.broadcast %cst_18 : f32 to vector<1x128xf32>
      %c0_19 = arith.constant 0 : index
      %c0_20 = arith.constant 0 : index
      %c0_21 = arith.constant 0 : index
      %29 = vector.load %arg4[%c0_19, %c0_20, %c0_21] : memref<1x1x128xf32, #tpu.memory_space<vmem>>, vector<1x1x128xf32>
      %30 = vector.shape_cast %29 : vector<1x1x128xf32> to vector<1x128xf32>
      %31 = vector.shape_cast %28 : vector<1x128xf32> to vector<1x1x128xf32>
      tpu.vector_store %arg4[%c0_19, %c0_20, %c0_21], %31 {strides = array<i32>} : memref<1x1x128xf32, #tpu.memory_space<vmem>>, vector<1x1x128xf32>,
    } else {
    }
    %c0 = arith.constant 0 : index
    %c0_1 = arith.constant 0 : index
    %c0_2 = arith.constant 0 : index
    %c0_3 = arith.constant 0 : index
    %3 = vector.load %arg2[%c0, %c0_1, %c0_2, %c0_3] : memref<1x4x2x128xf32, #tpu.memory_space<vmem>>, vector<1x4x2x128xf32>
    %4 = vector.shape_cast %3 : vector<1x4x2x128xf32> to vector<4x2x128xf32>
    %c0_4 = arith.constant 0 : index
    %c0_5 = arith.constant 0 : index
    %c0_6 = arith.constant 0 : index
    %c0_7 = arith.constant 0 : index
    %5 = vector.load %arg3[%c0_4, %c0_5, %c0_6, %c0_7] : memref<1x4x2x128xf32, #tpu.memory_space<vmem>>, vector<1x4x2x128xf32>
    %6 = vector.shape_cast %5 : vector<1x4x2x128xf32> to vector<4x2x128xf32>
    %cst = arith.constant dense<0xFF800000> : vector<2x128xf32>
    %7 = vector.multi_reduction <maximumf>, %4, %cst [0] : vector<4x2x128xf32> to vector<2x128xf32>
    %8 = vector.shape_cast %7 : vector<2x128xf32> to vector<1x2x128xf32>
    %9 = vector.broadcast %8 : vector<1x2x128xf32> to vector<4x2x128xf32>
    %10 = arith.subf %4, %9 : vector<4x2x128xf32>
    %11 = math.exp %10 : vector<4x2x128xf32>
    %cst_8 = arith.constant dense<0.000000e+00> : vector<2x128xf32>
    %12 = vector.multi_reduction <add>, %11, %cst_8 [0] : vector<4x2x128xf32> to vector<2x128xf32>
    %13 = math.log %12 : vector<2x128xf32>
    %14 = arith.addf %7, %13 : vector<2x128xf32>
    %15 = arith.mulf %4, %6 : vector<4x2x128xf32>
    %cst_9 = arith.constant dense<0.000000e+00> : vector<2x128xf32>
    %16 = vector.multi_reduction <add>, %15, %cst_9 [0] : vector<4x2x128xf32> to vector<2x128xf32>
    %cst_10 = arith.constant dense<0.000000e+00> : vector<2x128xf32>
    %17 = vector.multi_reduction <add>, %6, %cst_10 [0] : vector<4x2x128xf32> to vector<2x128xf32>
    %18 = arith.mulf %14, %17 : vector<2x128xf32>
    %19 = arith.subf %18, %16 : vector<2x128xf32>
    %c0_11 = arith.constant 0 : index
    %c0_12 = arith.constant 0 : index
    %c0_13 = arith.constant 0 : index
    %20 = vector.load %arg4[%c0_11, %c0_12, %c0_13] : memref<1x1x128xf32, #tpu.memory_space<vmem>>, vector<1x1x128xf32>
    %21 = vector.shape_cast %20 : vector<1x1x128xf32> to vector<1x128xf32>
    %cst_14 = arith.constant dense<0.000000e+00> : vector<128xf32>
    %22 = vector.multi_reduction <add>, %19, %cst_14 [0] : vector<2x128xf32> to vector<128xf32>
    %23 = vector.shape_cast %22 : vector<128xf32> to vector<1x128xf32>
    %24 = arith.addf %21, %23 : vector<1x128xf32>
    %c0_15 = arith.constant 0 : index
    %c0_16 = arith.constant 0 : index
    %c0_17 = arith.constant 0 : index
    %25 = vector.load %arg4[%c0_15, %c0_16, %c0_17] : memref<1x1x128xf32, #tpu.memory_space<vmem>>, vector<1x1x128xf32>
    %26 = vector.shape_cast %25 : vector<1x1x128xf32> to vector<1x128xf32>
    %27 = vector.shape_cast %24 : vector<1x128xf32> to vector<1x1x128xf32>
    tpu.vector_store %arg4[%c0_15, %c0_16, %c0_17], %27 {strides = array<i32>} : memref<1x1x128xf32, #tpu.memory_space<vmem>>, vector<1x1x128xf32>,
    return
  }
  func.func @transform_0(%arg0: i32, %arg1: i32) -> (i32, i32, i32, i32) {
    %c0_i32 = arith.constant 0 : i32
    %c0_i32_0 = arith.constant 0 : i32
    %c0_i32_1 = arith.constant 0 : i32
    return %arg0, %c0_i32, %arg1, %c0_i32_0 : i32, i32, i32, i32
  }
  func.func @transform_1(%arg0: i32, %arg1: i32) -> (i32, i32, i32, i32) {
    %c0_i32 = arith.constant 0 : i32
    %c0_i32_0 = arith.constant 0 : i32
    %c0_i32_1 = arith.constant 0 : i32
    return %arg0, %c0_i32, %arg1, %c0_i32_0 : i32, i32, i32, i32
  }
  func.func @transform_2(%arg0: i32, %arg1: i32) -> (i32, i32, i32) {
    %c0_i32 = arith.constant 0 : i32
    %c0_i32_0 = arith.constant 0 : i32
    %c0_i32_1 = arith.constant 0 : i32
    return %arg0, %c0_i32, %c0_i32_0 : i32, i32, i32
  }
}

</mosaic_0001>

<llo_original>
// kernel: tpu_custom_call.1
$region0: #{tpu_custom_call.1}
  #allocation0 [shape = 'u32[]', space=smem, size = 0x4, offset = 0x4, fixed_abs, tag = 'smem constant byte address 0x4 - core index']
  #allocation1 [shape = 'u32[144,128]{1,0:T(1,128)}', space=vmem, size = 0x12000, scoped, tag = 'internal scratch']
  %s0 = inlined_call_operand.hbm [shape: f32[2,4,2,128], index: 0, kind: input, shape index: {}]
  %s1 = inlined_call_operand.hbm [shape: f32[2,4,2,128], index: 1, kind: input, shape index: {}]
  %s2 = inlined_call_operand.hbm [shape: f32[2,1,128], index: 2, kind: output, shape index: {}]
  %s3 = sld [smem:[#allocation0]]
  $region53: #{tpu_custom_call.1} parent=0
    _
  %s5 = ssub.s32 1, %s3
  %s6 = scalar_select 0, %s5, %s3
  $region1: #{tpu_custom_call.1} parent=0
    #allocation2 [shape = 'u8[8192]{0}', space=vmem, size = 0x2000, scoped, tag = 'input window, operand 0']
    #allocation3 [shape = 's32[2]{0}', space=sflag, size = 0x8, scoped, tag = 'scoped memory for tpu_custom_call.1']
    #allocation4 [shape = 's32[2]{0}', space=sflag, size = 0x8, scoped, tag = 'scoped memory for tpu_custom_call.1']
    #allocation5 [shape = 'u8[8192]{0}', space=vmem, size = 0x2000, scoped, tag = 'input window, operand 1']
    #allocation6 [shape = 's32[2]{0}', space=sflag, size = 0x8, scoped, tag = 'scoped memory for tpu_custom_call.1']
    #allocation7 [shape = 'u8[1024]{0}', space=vmem, size = 0x400, scoped, tag = 'output window, operand 0']
    %7 = vsyncpa [#allocation3], 0
    %s8 = scalar_lea.sflag [#allocation3], 1
    %9 = vsyncpa %s8, 0
    %10 = vsyncpa [#allocation6], 0
    %s11 = scalar_lea.sflag [#allocation6], 1
    %12 = vsyncpa %s11, 0
    %13 = vsyncpa [#allocation4], 0
    %s14 = scalar_lea.sflag [#allocation4], 1
    %15 = vsyncpa %s14, 0
    loop: start=0, step=1, limit=4
    $region2: #{tpu_custom_call.1} parent=1 // loop_pre_header
      _
    $region3: #{tpu_custom_call.1} parent=1 // loop_header
      %s17 = sphi 0, %s21
      %p18 = scmp.ge.s32.totalorder %s17, 4
      %s24 = sphi 0, %s36
      %s25 = sphi 0, %s32
      %s26 = sphi 0, %s24
      %s27 = sphi 0, %s25
      %s28 = sphi 0, %s26
      %s29 = sphi 0, %s27
      %s41 = sphi 0, %s43
      %s44 = sphi 0, %s41
      %s45 = sphi 0, %s44
      %s61 = sphi 0, %s45
      %s69 = sphi 0, %s71
      %s72 = sphi 0, %s69
      %s73 = sphi 0, %s72
      %s89 = sphi 0, %s73
      %s95 = sphi 0, %s97
      %s98 = sphi 0, %s95
      %s99 = sphi 0, %s98
      %s115 = sphi 0, %s99
    $region4: #{tpu_custom_call.1} parent=1 // loop_header_branch
      %20 = sbr.rel (%p18) target = $region8
    $region5: #{tpu_custom_call.1} parent=1 // loop_body
      %s22 = ssub.s32 %s17, 1
      %s23 = ssub.s32 %s17, 2
      %s30 = sadd.s32 1, %s25
      %p31 = scmp.ge.s32.totalorder %s30, 1
      %s32 = scalar_select %p31, 0, %s30
      %s33 = sadd.s32 1, %s24
      %s34 = scalar_select %p31, %s33, %s24
      %p35 = scmp.ge.s32.totalorder %s34, 2
      %s36 = scalar_select %p35, 0, %s34
      %s37 = ssub.s32 %s24, %s36
      %s38 = ssub.s32 %s25, %s32
      %s39 = sor.u32 %s37, %s38
      %p40 = scmp.eq.s32.totalorder %s39, 0
      %s42 = sadd.s32 %s41, 1
      %s43 = scalar_select %p40, %s41, %s42
      %p46 = pneg %p40
      %p47 = scmp.eq.s32.totalorder %s17, 1
      %p48 = por %p46, %p47
      %p49 = scmp.ne.s32.totalorder %s41, %s44
      %p50 = scmp.eq.s32.totalorder %s17, 0
      %p51 = por %p49, %p50
      %p52 = scmp.ne.s32.totalorder %s41, %s44
      %p53 = scmp.eq.s32.totalorder %s22, 1
      %p54 = por %p52, %p53
      %p55 = scmp.ne.s32.totalorder %s44, %s45
      %p56 = scmp.eq.s32.totalorder %s22, 0
      %p57 = por %p55, %p56
      %p58 = scmp.ne.s32.totalorder %s44, %s45
      %p59 = scmp.eq.s32.totalorder %s23, 1
      %p60 = por %p58, %p59
      %p62 = scmp.ne.s32.totalorder %s45, %s61
      %p63 = scmp.eq.s32.totalorder %s23, 0
      %p64 = por %p62, %p63
      %s65 = ssub.s32 %s24, %s36
      %s66 = ssub.s32 %s25, %s32
      %s67 = sor.u32 %s65, %s66
      %p68 = scmp.eq.s32.totalorder %s67, 0
      %s70 = sadd.s32 %s69, 1
      %s71 = scalar_select %p68, %s69, %s70
      %p74 = pneg %p68
      %p75 = scmp.eq.s32.totalorder %s17, 1
      %p76 = por %p74, %p75
      %p77 = scmp.ne.s32.totalorder %s69, %s72
      %p78 = scmp.eq.s32.totalorder %s17, 0
      %p79 = por %p77, %p78
      %p80 = scmp.ne.s32.totalorder %s69, %s72
      %p81 = scmp.eq.s32.totalorder %s22, 1
      %p82 = por %p80, %p81
      %p83 = scmp.ne.s32.totalorder %s72, %s73
      %p84 = scmp.eq.s32.totalorder %s22, 0
      %p85 = por %p83, %p84
      %p86 = scmp.ne.s32.totalorder %s72, %s73
      %p87 = scmp.eq.s32.totalorder %s23, 1
      %p88 = por %p86, %p87
      %p90 = scmp.ne.s32.totalorder %s73, %s89
      %p91 = scmp.eq.s32.totalorder %s23, 0
      %p92 = por %p90, %p91
      %s93 = ssub.s32 %s24, %s36
      %p94 = scmp.eq.s32.totalorder %s93, 0
      %s96 = sadd.s32 %s95, 1
      %s97 = scalar_select %p94, %s95, %s96
      %p100 = pneg %p94
      %p101 = scmp.eq.s32.totalorder %s17, 1
      %p102 = por %p100, %p101
      %p103 = scmp.ne.s32.totalorder %s95, %s98
      %p104 = scmp.eq.s32.totalorder %s17, 0
      %p105 = por %p103, %p104
      %p106 = scmp.ne.s32.totalorder %s95, %s98
      %p107 = scmp.eq.s32.totalorder %s22, 1
      %p108 = por %p106, %p107
      %p109 = scmp.ne.s32.totalorder %s98, %s99
      %p110 = scmp.eq.s32.totalorder %s22, 0
      %p111 = por %p109, %p110
      %p112 = scmp.ne.s32.totalorder %s98, %s99
      %p113 = scmp.eq.s32.totalorder %s23, 1
      %p114 = por %p112, %p113
      %p116 = scmp.ne.s32.totalorder %s99, %s115
      %p117 = scmp.eq.s32.totalorder %s23, 0
      %p118 = por %p116, %p117
      %p119 = scmp.le.s32.totalorder 1, %s17
      %p120 = scmp.lt.s32.totalorder %s17, 3
      %p121 = pnand %p119, %p120
      %p122 = pneg %p121
      // Predicated region
      $region9: #{tpu_custom_call.1} parent=5 // pred_check
        _
      $region10: #{tpu_custom_call.1} parent=5 // pred_check_branch
        %124 = sbr.rel (%p121) target = $region12
      $region11: #{tpu_custom_call.1} parent=5 // pred_region
        %s125 = ssub.s32 %s17, 1
      $region12: #{tpu_custom_call.1} parent=5 // pred_fallthru
        _
      %p126 = scmp.lt.s32.totalorder %s17, 2
      // Predicated region
      $region13: #{tpu_custom_call.1} parent=5 // pred_check
        %p127 = pneg %p126
      $region14: #{tpu_custom_call.1} parent=5 // pred_check_branch
        %129 = sbr.rel (%p127) target = $region16
      $region15: #{tpu_custom_call.1} parent=5 // pred_region
        // Predicated region
        $region17: #{tpu_custom_call.1} parent=15 // pred_check
          %p130 = pneg %p51
        $region18: #{tpu_custom_call.1} parent=15 // pred_check_branch
          %132 = sbr.rel (%p130) target = $region20
        $region19: #{tpu_custom_call.1} parent=15 // pred_region
          %s133 = sand.u32 %s41, 1
          %s134 = scalar_lea.sflag [#allocation3], %s133
          %s135 = sand.u32 %s41, 1
          %s136 = smul.addr %s135, 8
          %s137 = scalar_lea.vmem [#allocation2], %s136
          %s139 = ssub.s32 128, 128
          %140 = vsyncadd %s134, %s139
          %s141 = smul.addr %s24, 4
          %s142 = sadd.s32 %s25, %s141
          %s143 = smul.addr %s142, 32
          %s144 = scalar_lea.hbm %s0, %s143
          %s145 = sshll.u32 %s137, 4
          %s146 = int_to_ptr.vmem [resolvable:$true] %s145
          %151 = dma.hbm_to_vmem [thread:$0]  %s144, 128, %s146, %s134, 32, 32, 2
        $region20: #{tpu_custom_call.1} parent=15 // pred_fallthru
          _
        // Predicated region
        $region21: #{tpu_custom_call.1} parent=15 // pred_check
          %p152 = pneg %p79
        $region22: #{tpu_custom_call.1} parent=15 // pred_check_branch
          %154 = sbr.rel (%p152) target = $region24
        $region23: #{tpu_custom_call.1} parent=15 // pred_region
          %s155 = sand.u32 %s69, 1
          %s156 = scalar_lea.sflag [#allocation6], %s155
          %s157 = sand.u32 %s69, 1
          %s158 = smul.addr %s157, 8
          %s159 = scalar_lea.vmem [#allocation5], %s158
          %s161 = ssub.s32 128, 128
          %162 = vsyncadd %s156, %s161
          %s163 = smul.addr %s24, 4
          %s164 = sadd.s32 %s25, %s163
          %s165 = smul.addr %s164, 32
          %s166 = scalar_lea.hbm %s1, %s165
          %s167 = sshll.u32 %s159, 4
          %s168 = int_to_ptr.vmem [resolvable:$true] %s167
          %173 = dma.hbm_to_vmem [thread:$0]  %s166, 128, %s168, %s156, 32, 32, 2
        $region24: #{tpu_custom_call.1} parent=15 // pred_fallthru
          _
      $region16: #{tpu_custom_call.1} parent=5 // pred_fallthru
        _
      %p174 = scmp.le.s32.totalorder 1, %s17
      %p175 = scmp.lt.s32.totalorder %s17, 3
      %p176 = pnand %p174, %p175
      %p177 = pneg %p176
      // Predicated region
      $region25: #{tpu_custom_call.1} parent=5 // pred_check
        _
      $region26: #{tpu_custom_call.1} parent=5 // pred_check_branch
        %179 = sbr.rel (%p176) target = $region28
      $region27: #{tpu_custom_call.1} parent=5 // pred_region
        %s180 = ssub.s32 %s17, 1
        %s181 = sand.u32 %s44, 1
        %s182 = scalar_lea.sflag [#allocation3], %s181
        %s183 = sand.u32 %s44, 1
        %s184 = smul.addr %s183, 8
        %s185 = scalar_lea.vmem [#allocation2], %s184
        // Predicated region
        $region29: #{tpu_custom_call.1} parent=27 // pred_check
          %p186 = pneg %p57
        $region30: #{tpu_custom_call.1} parent=27 // pred_check_branch
          %188 = sbr.rel (%p186) target = $region32
        $region31: #{tpu_custom_call.1} parent=27 // pred_region
          %189 = dma.done %s182, 128
        $region32: #{tpu_custom_call.1} parent=27 // pred_fallthru
          _
        %s190 = sand.u32 %s72, 1
        %s191 = scalar_lea.sflag [#allocation6], %s190
        %s192 = sand.u32 %s72, 1
        %s193 = smul.addr %s192, 8
        %s194 = scalar_lea.vmem [#allocation5], %s193
        // Predicated region
        $region33: #{tpu_custom_call.1} parent=27 // pred_check
          %p195 = pneg %p85
        $region34: #{tpu_custom_call.1} parent=27 // pred_check_branch
          %197 = sbr.rel (%p195) target = $region36
        $region35: #{tpu_custom_call.1} parent=27 // pred_region
          %198 = dma.done %s191, 128
        $region36: #{tpu_custom_call.1} parent=27 // pred_fallthru
          _
        %s199 = sand.u32 %s44, 1
        %s200 = scalar_lea.sflag [#allocation3], %s199
        %s201 = sand.u32 %s44, 1
        %s202 = smul.addr %s201, 8
        %s203 = scalar_lea.vmem [#allocation2], %s202
        %p204 = pneg %p57
        %p205 = pneg %p54
        %s206 = sand.u32 %s72, 1
        %s207 = scalar_lea.sflag [#allocation6], %s206
        %s208 = sand.u32 %s72, 1
        %s209 = smul.addr %s208, 8
        %s210 = scalar_lea.vmem [#allocation5], %s209
        %p211 = pneg %p85
        %p212 = pneg %p82
        %p213 = pneg %p111
        %p214 = pneg %p108
        %s215 = sand.u32 %s98, 1
        %s216 = scalar_lea.sflag [#allocation4], %s215
        %s217 = sand.u32 %s98, 1
        %s218 = scalar_lea.vmem [#allocation7], %s217
        %p219 = scmp.eq.s32.totalorder %s27, 0
        // Predicated region
        $region37: #{tpu_custom_call.1} parent=27 // pred_check
          %p220 = pneg %p219
        $region38: #{tpu_custom_call.1} parent=27 // pred_check_branch
          %222 = sbr.rel (%p220) target = $region40
        $region39: #{tpu_custom_call.1} parent=27 // pred_region
          %223 = vst [vmem:[%s218] sm:$0x1] 0.0
        $region40: #{tpu_custom_call.1} parent=27 // pred_fallthru
          _
        %v224 = vld [vmem:[%s185] sm:$0x3]
        %v225 = vld [vmem:[%s185 + $0x2] sm:$0x3]
        %v226 = vld [vmem:[%s185 + $0x4] sm:$0x3]
        %v227 = vld [vmem:[%s185 + $0x6] sm:$0x3]
        %v228 = vld [vmem:[%s194] sm:$0x3]
        %v229 = vld [vmem:[%s194 + $0x2] sm:$0x3]
        %v230 = vld [vmem:[%s194 + $0x4] sm:$0x3]
        %v231 = vld [vmem:[%s194 + $0x6] sm:$0x3]
        %vm232 = vcmask 1041408
        %v233 = vsel %vm232, %v224, -inf
        %v234 = vsel %vm232, %v225, -inf
        %v235 = vsel %vm232, %v226, -inf
        %v236 = vsel %vm232, %v227, -inf
        %v237 = vmax.f32 %v233, %v234
        %v238 = vmax.f32 %v235, %v236
        %v239 = vmax.f32 %v237, %v238
        %v240 = vsub.f32 %v224, %v239
        %v241 = vsub.f32 %v225, %v239
        %v242 = vsub.f32 %v226, %v239
        %v243 = vsub.f32 %v227, %v239
        %v244 = vmul.f32 %v240, 1.442695
        %v245 = vpow.pop %v244
        %v246 = vmul.f32 %v241, 1.442695
        %v247 = vpow.pop %v246
        %v248 = vmul.f32 %v242, 1.442695
        %v249 = vpow.pop %v248
        %v250 = vmul.f32 %v243, 1.442695
        %v251 = vpow.pop %v250
        %v252 = vsel %vm232, %v245, 0.0
        %v253 = vsel %vm232, %v247, 0.0
        %v254 = vadd.f32 %v252, %v253
        %v255 = vsel %vm232, %v249, 0.0
        %v256 = vadd.f32 %v254, %v255
        %v257 = vsel %vm232, %v251, 0.0
        %v258 = vadd.f32 %v256, %v257
        %v259 = vlog2.pop %v258
        %v260 = vmul.f32 %v259, 0.6931472
        %v261 = vadd.f32 %v239, %v260
        %v262 = vmul.f32 %v224, %v228
        %v263 = vmul.f32 %v225, %v229
        %v264 = vmul.f32 %v226, %v230
        %v265 = vmul.f32 %v227, %v231
        %v266 = vsel %vm232, %v262, 0.0
        %v267 = vsel %vm232, %v263, 0.0
        %v268 = vadd.f32 %v266, %v267
        %v269 = vsel %vm232, %v264, 0.0
        %v270 = vadd.f32 %v268, %v269
        %v271 = vsel %vm232, %v265, 0.0
        %v272 = vadd.f32 %v270, %v271
        %v273 = vsel %vm232, %v228, 0.0
        %v274 = vsel %vm232, %v229, 0.0
        %v275 = vadd.f32 %v273, %v274
        %v276 = vsel %vm232, %v230, 0.0
        %v277 = vadd.f32 %v275, %v276
        %v278 = vsel %vm232, %v231, 0.0
        %v279 = vadd.f32 %v277, %v278
        %v280 = vmul.f32 %v261, %v279
        %v281 = vsub.f32 %v280, %v272
        %v282 = vld [vmem:[%s218] sm:$0x1]
        %v283 = vsel %vm232, %v281, 0.0
        %v284 = vrot.slane %v283, 4
        %v285 = vadd.f32 %v283, %v284
        %v286 = vrot.slane %v285, 2
        %v287 = vadd.f32 %v285, %v286
        %v288 = vrot.slane %v287, 1
        %v289 = vadd.f32 %v287, %v288
        %v290 = vadd.f32 %v282, %v289
        %291 = vst [vmem:[%s218] sm:$0x1] %v290
        %s292 = sand.u32 %s98, 1
        %s293 = scalar_lea.sflag [#allocation4], %s292
        %s294 = sand.u32 %s98, 1
        %s295 = scalar_lea.vmem [#allocation7], %s294
        // Predicated region
        $region41: #{tpu_custom_call.1} parent=27 // pred_check
          %p296 = pneg %p108
        $region42: #{tpu_custom_call.1} parent=27 // pred_check_branch
          %298 = sbr.rel (%p296) target = $region44
        $region43: #{tpu_custom_call.1} parent=27 // pred_region
          %s300 = ssub.s32 16, 16
          %301 = vsyncadd %s293, %s300
          %s302 = smul.addr %s26, 16
          %s303 = scalar_lea.hbm %s2, %s302
          %s305 = sshll.u32 %s295, 4
          %s306 = int_to_ptr.vmem [resolvable:$true] %s305
          %308 = dma.vmem_to_hbm [thread:$0]  %s306, 16, %s303, %s293
        $region44: #{tpu_custom_call.1} parent=27 // pred_fallthru
          _
      $region28: #{tpu_custom_call.1} parent=5 // pred_fallthru
        _
      %p309 = scmp.le.s32.totalorder 2, %s17
      // Predicated region
      $region45: #{tpu_custom_call.1} parent=5 // pred_check
        %p310 = pneg %p309
      $region46: #{tpu_custom_call.1} parent=5 // pred_check_branch
        %312 = sbr.rel (%p310) target = $region48
      $region47: #{tpu_custom_call.1} parent=5 // pred_region
        %s313 = ssub.s32 %s17, 2
        // Predicated region
        $region49: #{tpu_custom_call.1} parent=47 // pred_check
          %p314 = pneg %p114
        $region50: #{tpu_custom_call.1} parent=47 // pred_check_branch
          %316 = sbr.rel (%p314) target = $region52
        $region51: #{tpu_custom_call.1} parent=47 // pred_region
          %s317 = sand.u32 %s99, 1
          %s318 = scalar_lea.sflag [#allocation4], %s317
          %s319 = sand.u32 %s99, 1
          %s320 = scalar_lea.vmem [#allocation7], %s319
          %321 = dma.done %s318, 16
        $region52: #{tpu_custom_call.1} parent=47 // pred_fallthru
          _
      $region48: #{tpu_custom_call.1} parent=5 // pred_fallthru
        _
    $region6: #{tpu_custom_call.1} parent=1 // loop_footer
      %s21 = sadd.s32 1, %s17
    $region7: #{tpu_custom_call.1} parent=1 // loop_footer_branch
      %16 = sbr.rel target = $region3
    $region8: #{tpu_custom_call.1} parent=1 // loop_exit
      _
    %322 = vsyncpa [#allocation3], 1
    %s323 = scalar_lea.sflag [#allocation3], 1
    %324 = vsyncpa %s323, 1
    %325 = vsyncpa [#allocation6], 1
    %s326 = scalar_lea.sflag [#allocation6], 1
    %327 = vsyncpa %s326, 1
    %328 = vsyncpa [#allocation4], 1
    %s329 = scalar_lea.sflag [#allocation4], 1
    %330 = vsyncpa %s329, 1

</llo_original>
